<compile_context>
chip_gen: v5e
topology: v5e:2x2
jax: 0.10.0
libtpu: 0.0.40
codegen_flags: <defaults>
</compile_context>

<pallas_src>
import jax
import jax.numpy as jnp
from jax import lax
from jax.experimental import pallas as pl
from jax.experimental.pallas import tpu as pltpu


# ----------------------------------------------------------------------------
# Pallas kernel: per image, 4 pool-parities x 2 row-taps of (M,128)@(128,128),
# incremental max-pool fold, bias + ReLU, lane-dense (M,128) store.
# ----------------------------------------------------------------------------
def _make_kernel(M, PWp):
    def kernel(e_ref, w_ref, b_ref, o_ref):
        # e_ref : (1, 4, (PH+1)*PWp, 128)  bf16 patch slab for this image (streamed)
        # w_ref : (2, 128, 128)            resident tap weights
        # b_ref : (1, 128)                 resident bias (f32)
        # o_ref : (1, M, 128)              pooled+ReLU'd output tile (f32)
        w0 = w_ref[0]
        w1 = w_ref[1]

        def conv_parity(p):
            slab = e_ref[0, p]                 # ((PH+1)*PWp, 128)
            lo = slab[0:M, :]                  # rows j = 0..PH-1
            hi = slab[PWp:PWp + M, :]          # rows j = 1..PH   (shift by one PWp row)
            acc = jnp.dot(lo, w0, preferred_element_type=jnp.float32)
            acc = acc + jnp.dot(hi, w1, preferred_element_type=jnp.float32)
            return acc                         # conv output for this pool-window corner

        # Incremental 2x2 max-pool fold: at most two (M,128) f32 results live at once.
        m = conv_parity(0)
        for p in range(1, 4):
            m = jnp.maximum(m, conv_parity(p))

        # max_p(relu(x_p + b)) == relu(max_p(x_p) + b): bias is per-channel constant
        # across the pool window and relu is monotone.
        o_ref[0] = jnp.maximum(m + b_ref[...], 0.0).astype(o_ref.dtype)

    return kernel


# ----------------------------------------------------------------------------
# Wrapper
# ----------------------------------------------------------------------------
def conv7x7_relu_pool_pallas(x_nhwc, w_oihw, b, *, compute_dtype=jnp.bfloat16):
    """Conv2d(3,64,7,stride=2,pad=3) + ReLU + MaxPool2d(2,2), fused.

    x_nhwc : (N, H, W, 3) float32, H and W divisible by 4
    w_oihw : (64, 3, 7, 7) float32 (PyTorch layout)
    b      : (64,) float32
    returns: (N, H//4, W//4, 64) float32, NHWC
    """
    N, H, W, Cin = x_nhwc.shape
    Cout, _, KH, KW = w_oihw.shape
    assert (KH, KW, Cin) == (7, 7, 3)
    assert H % 4 == 0 and W % 4 == 0, "kernel assumes H, W divisible by 4"
    # TODO(synk): general (non multiple-of-4) spatial sizes need tail handling.

    PH, PW = H // 4, W // 4                 # pooled output size (OH=2*PH, OW=2*PW)
    PWp = max(8, ((PW + 7) // 8) * 8)       # pad pooled width to a sublane multiple
    J = PH + 1                              # row-tap window needs one extra j row
    M = PH * PWp                            # matmul M / output rows per image
    CIN_P, COUT_P, KP = 4, 128, 128

    # Pad input: +3 spatial (the conv padding), channel 3->4; cast to the bf16 stream
    # dtype as early as possible (all following glue runs at half the HBM bytes).
    xp = jnp.pad(x_nhwc.astype(compute_dtype),
                 ((0, 0), (3, 3), (3, 3), (0, CIN_P - Cin)))

    # Partial im2col, built directly from the padded input with strided slices:
    #   E[n, rp*2+wp, j*PWp+pw, j2*64 + dw*16 + php*8 + pwp*4 + ci]
    #       = x_pad[n, 4*j + 2*rp + 2*j2 + php, 4*pw + 2*wp + 2*dw + pwp, ci]
    # (rp, wp) = 2x2 pool-window corner, j = pooled row (+1 halo), pw = pooled col,
    # j2/php = row taps inside one 128-wide K block, dw/pwp = column taps, ci = Cin.
    slabs = []
    for rp in range(2):
        for wp in range(2):
            groups = []
            for j2 in range(2):
                for dw in range(4):
                    for php in range(2):
                        for pwp in range(2):
                            r0 = 2 * rp + 2 * j2 + php
                            c0 = 2 * wp + 2 * dw + pwp
                            groups.append(
                                xp[:, r0:r0 + 4 * PH + 1:4,
                                      c0:c0 + 4 * (PW - 1) + 1:4, :])   # (N,PH+1,PW,4)
            ep = jnp.concatenate(groups, axis=-1)                       # (N,PH+1,PW,128)
            ep = jnp.pad(ep, ((0, 0), (0, 0), (0, PWp - PW), (0, 0)))   # pw -> PWp
            slabs.append(ep.reshape(N, J * PWp, KP))
    e = jnp.stack(slabs, axis=1)                                        # (N,4,J*PWp,128)

    # Weights -> two (128,128) tap matrices with EXACTLY the same channel ordering
    # as E (loop nesting j2 -> dw -> php -> pwp, ci innermost).  Tap 0 covers conv
    # kernel rows kh = 0..3, tap 1 covers kh = 4..7 (kh=7 / kw=7 rows are zero pad).
    wt = jnp.transpose(w_oihw, (2, 3, 1, 0)).astype(jnp.float32)        # (7,7,3,64)
    wt = jnp.pad(wt, ((0, 1), (0, 1), (0, CIN_P - Cin), (0, COUT_P - Cout)))
    taps = []
    for t in range(2):
        rows = []
        for j2 in range(2):
            for dw in range(4):
                for php in range(2):
                    for pwp in range(2):
                        rows.append(wt[2 * (2 * t + j2) + php, 2 * dw + pwp])  # (4,128)
        taps.append(jnp.concatenate(rows, axis=0))                      # (128,128)
    w_taps = jnp.stack(taps, axis=0).astype(compute_dtype)              # (2,128,128)

    b_mat = jnp.zeros((1, COUT_P), jnp.float32).at[:, :Cout].set(b.reshape(1, Cout))

    # Real (unpadded) conv FLOPs, per the review.
    cost = pl.CostEstimate(
        flops=2 * N * (2 * PH) * (2 * PW) * (KH * KW * Cin) * Cout,
        transcendentals=0,
        bytes_accessed=int(e.size * e.dtype.itemsize
                           + w_taps.size * w_taps.dtype.itemsize
                           + b_mat.size * 4
                           + N * M * COUT_P * 4),
    )

    out = pl.pallas_call(
        _make_kernel(M, PWp),
        out_shape=jax.ShapeDtypeStruct((N, M, COUT_P), jnp.float32),
        grid=(N,),
        in_specs=[
            pl.BlockSpec((1, 4, J * PWp, KP), lambda n: (n, 0, 0, 0)),  # streamed E
            pl.BlockSpec((2, KP, COUT_P), lambda n: (0, 0, 0)),         # resident W
            pl.BlockSpec((1, COUT_P), lambda n: (0, 0)),                # resident bias
        ],
        out_specs=pl.BlockSpec((1, M, COUT_P), lambda n: (n, 0, 0)),
        compiler_params=pltpu.CompilerParams(
            dimension_semantics=("parallel",)),   # images shard across v7x's 2 TCs
        cost_estimate=cost,
    )(e, w_taps, b_mat)

    # Strip the lane/width padding.  (Downstream consumers could take the padded
    # (N, M, 128) layout directly and skip this output-sized XLA pass.)
    return out.reshape(N, PH, PWp, COUT_P)[:, :, :PW, :Cout]


def resnet18_forward(x_nchw, params, *, compute_dtype=jnp.bfloat16):
    """Reproduces ResNet18.forward: pool(relu(conv7x7(x))).

    x_nchw : (N, 3, H, W) float32
    returns: (N, H//4, W//4, 64) float32, NHWC (kept NHWC per the perf review to
             avoid an extra output-sized HBM transpose).
    """
    x = jnp.transpose(x_nchw, (0, 2, 3, 1))        # NCHW -> NHWC (raw-input-sized pass)
    y = conv7x7_relu_pool_pallas(x, params["conv7x7_w"], params["conv7x7_b"],
                                 compute_dtype=compute_dtype)
    # TODO(synk): the PyTorch forward never calls block1..block4 and has no return
    # statement (returns None); we return the pooled activation (NHWC) instead.
    return y


def reference_forward(x_nchw, params):
    """Pure-JAX f32 reference: conv7x7(s=2,p=3) + bias + ReLU + maxpool 2x2."""
    x = jnp.transpose(x_nchw, (0, 2, 3, 1)).astype(jnp.float32)
    w = jnp.transpose(params["conv7x7_w"], (2, 3, 1, 0))        # HWIO
    y = lax.conv_general_dilated(x, w, window_strides=(2, 2),
                                 padding=((3, 3), (3, 3)),
                                 dimension_numbers=("NHWC", "HWIO", "NHWC"))
    y = jax.nn.relu(y + params["conv7x7_b"][None, None, None, :])
    N, OH, OW, C = y.shape
    y = y[:, :OH - OH % 2, :OW - OW % 2, :]
    return y.reshape(N, OH // 2, 2, OW // 2, 2, C).max(axis=(2, 4))


def init_params(key):
    """Deterministic init of the parameters actually used by forward()."""
    k_w, k_b = jax.random.split(key)
    fan_in = 3 * 7 * 7
    w = jax.random.normal(k_w, (64, 3, 7, 7), jnp.float32) * (2.0 / fan_in) ** 0.5
    b = jax.random.normal(k_b, (64,), jnp.float32) * 0.01
    return {"conv7x7_w": w, "conv7x7_b": b}


if __name__ == "__main__":
    key = jax.random.PRNGKey(0)
    k_x, k_p = jax.random.split(key)

    # small input consistent with the module: batch=2, 3 channels, 32x32 spatial
    x = jax.random.normal(k_x, (2, 3, 32, 32), jnp.float32)
    params = init_params(k_p)

    fwd = jax.jit(resnet18_forward)
    out = jax.block_until_ready(fwd(x, params))

    assert out.shape == (2, 8, 8, 64), out.shape
    assert out.dtype == jnp.float32
    assert bool(jnp.all(jnp.isfinite(out)))
    assert bool(jnp.all(out >= 0.0))            # ReLU + max of non-negatives

    # Correctness vs. an f32 XLA reference.  The kernel streams bf16 operands with
    # f32 accumulation, so allow bf16-level tolerance (expected max rel err ~1e-2).
    ref = jax.block_until_ready(reference_forward(x, params))
    rel_err = float(jnp.max(jnp.abs(out - ref) / (1.0 + jnp.abs(ref))))
    assert rel_err < 0.06, f"mismatch vs reference: {rel_err}"

    print("KERNEL_OK")
</pallas_src>

<mosaic_0001>
module attributes {stable_mosaic.version = 11 : i64} {
  func.func @kernel(%arg0: i32, %arg1: memref<1x4x72x128xbf16, #tpu.memory_space<vmem>>, %arg2: memref<2x128x128xbf16, #tpu.memory_space<vmem>>, %arg3: memref<1x128xf32, #tpu.memory_space<vmem>>, %arg4: memref<1x64x128xf32, #tpu.memory_space<vmem>>) attributes {dimension_semantics = [#tpu.dimension_semantics<parallel>], iteration_bounds = array<i64: 2>, scalar_prefetch = 0 : i64, scratch_operands = 0 : i64, tpu.core_type = #tpu.core_type<tc>, window_params = [{transform_indices = @transform_0, window_bounds = array<i64: 1, 4, 72, 128>}, {pipeline_mode = #tpu.pipeline_mode<synchronous>, transform_indices = @transform_1, window_bounds = array<i64: 2, 128, 128>}, {pipeline_mode = #tpu.pipeline_mode<synchronous>, transform_indices = @transform_2, window_bounds = array<i64: 1, 128>}, {transform_indices = @transform_3, window_bounds = array<i64: 1, 64, 128>}]} {
    %c0 = arith.constant 0 : index
    %c0_0 = arith.constant 0 : index
    %c0_1 = arith.constant 0 : index
    %0 = vector.load %arg2[%c0, %c0_0, %c0_1] : memref<2x128x128xbf16, #tpu.memory_space<vmem>>, vector<1x128x128xbf16>
    %1 = vector.shape_cast %0 : vector<1x128x128xbf16> to vector<128x128xbf16>
    %c1 = arith.constant 1 : index
    %c0_2 = arith.constant 0 : index
    %c0_3 = arith.constant 0 : index
    %2 = vector.load %arg2[%c1, %c0_2, %c0_3] : memref<2x128x128xbf16, #tpu.memory_space<vmem>>, vector<1x128x128xbf16>
    %3 = vector.shape_cast %2 : vector<1x128x128xbf16> to vector<128x128xbf16>
    %c0_4 = arith.constant 0 : index
    %c0_5 = arith.constant 0 : index
    %c0_6 = arith.constant 0 : index
    %c0_7 = arith.constant 0 : index
    %4 = vector.load %arg1[%c0_4, %c0_5, %c0_6, %c0_7] : memref<1x4x72x128xbf16, #tpu.memory_space<vmem>>, vector<1x1x72x128xbf16>
    %5 = vector.shape_cast %4 : vector<1x1x72x128xbf16> to vector<72x128xbf16>
    %6 = vector.extract_strided_slice %5 {offsets = [0, 0], sizes = [64, 128], strides = [1, 1]} : vector<72x128xbf16> to vector<64x128xbf16>
    %7 = vector.extract_strided_slice %5 {offsets = [8, 0], sizes = [64, 128], strides = [1, 1]} : vector<72x128xbf16> to vector<64x128xbf16>
    %cst = arith.constant dense<0.000000e+00> : vector<64x128xf32>
    %8 = tpu.matmul %6, %1, %cst {dimension_numbers = #tpu.dot_dimension_numbers<[1], [0], [0], [1], [0, 0, 1, 1], [], []>} : vector<64x128xbf16>, vector<128x128xbf16>, vector<64x128xf32> -> vector<64x128xf32>
    %cst_8 = arith.constant dense<0.000000e+00> : vector<64x128xf32>
    %9 = tpu.matmul %7, %3, %cst_8 {dimension_numbers = #tpu.dot_dimension_numbers<[1], [0], [0], [1], [0, 0, 1, 1], [], []>} : vector<64x128xbf16>, vector<128x128xbf16>, vector<64x128xf32> -> vector<64x128xf32>
    %10 = arith.addf %8, %9 : vector<64x128xf32>
    %c0_9 = arith.constant 0 : index
    %c1_10 = arith.constant 1 : index
    %c0_11 = arith.constant 0 : index
    %c0_12 = arith.constant 0 : index
    %11 = vector.load %arg1[%c0_9, %c1_10, %c0_11, %c0_12] : memref<1x4x72x128xbf16, #tpu.memory_space<vmem>>, vector<1x1x72x128xbf16>
    %12 = vector.shape_cast %11 : vector<1x1x72x128xbf16> to vector<72x128xbf16>
    %13 = vector.extract_strided_slice %12 {offsets = [0, 0], sizes = [64, 128], strides = [1, 1]} : vector<72x128xbf16> to vector<64x128xbf16>
    %14 = vector.extract_strided_slice %12 {offsets = [8, 0], sizes = [64, 128], strides = [1, 1]} : vector<72x128xbf16> to vector<64x128xbf16>
    %cst_13 = arith.constant dense<0.000000e+00> : vector<64x128xf32>
    %15 = tpu.matmul %13, %1, %cst_13 {dimension_numbers = #tpu.dot_dimension_numbers<[1], [0], [0], [1], [0, 0, 1, 1], [], []>} : vector<64x128xbf16>, vector<128x128xbf16>, vector<64x128xf32> -> vector<64x128xf32>
    %cst_14 = arith.constant dense<0.000000e+00> : vector<64x128xf32>
    %16 = tpu.matmul %14, %3, %cst_14 {dimension_numbers = #tpu.dot_dimension_numbers<[1], [0], [0], [1], [0, 0, 1, 1], [], []>} : vector<64x128xbf16>, vector<128x128xbf16>, vector<64x128xf32> -> vector<64x128xf32>
    %17 = arith.addf %15, %16 : vector<64x128xf32>
    %18 = arith.maximumf %10, %17 : vector<64x128xf32>
    %c0_15 = arith.constant 0 : index
    %c2 = arith.constant 2 : index
    %c0_16 = arith.constant 0 : index
    %c0_17 = arith.constant 0 : index
    %19 = vector.load %arg1[%c0_15, %c2, %c0_16, %c0_17] : memref<1x4x72x128xbf16, #tpu.memory_space<vmem>>, vector<1x1x72x128xbf16>
    %20 = vector.shape_cast %19 : vector<1x1x72x128xbf16> to vector<72x128xbf16>
    %21 = vector.extract_strided_slice %20 {offsets = [0, 0], sizes = [64, 128], strides = [1, 1]} : vector<72x128xbf16> to vector<64x128xbf16>
    %22 = vector.extract_strided_slice %20 {offsets = [8, 0], sizes = [64, 128], strides = [1, 1]} : vector<72x128xbf16> to vector<64x128xbf16>
    %cst_18 = arith.constant dense<0.000000e+00> : vector<64x128xf32>
    %23 = tpu.matmul %21, %1, %cst_18 {dimension_numbers = #tpu.dot_dimension_numbers<[1], [0], [0], [1], [0, 0, 1, 1], [], []>} : vector<64x128xbf16>, vector<128x128xbf16>, vector<64x128xf32> -> vector<64x128xf32>
    %cst_19 = arith.constant dense<0.000000e+00> : vector<64x128xf32>
    %24 = tpu.matmul %22, %3, %cst_19 {dimension_numbers = #tpu.dot_dimension_numbers<[1], [0], [0], [1], [0, 0, 1, 1], [], []>} : vector<64x128xbf16>, vector<128x128xbf16>, vector<64x128xf32> -> vector<64x128xf32>
    %25 = arith.addf %23, %24 : vector<64x128xf32>
    %26 = arith.maximumf %18, %25 : vector<64x128xf32>
    %c0_20 = arith.constant 0 : index
    %c3 = arith.constant 3 : index
    %c0_21 = arith.constant 0 : index
    %c0_22 = arith.constant 0 : index
    %27 = vector.load %arg1[%c0_20, %c3, %c0_21, %c0_22] : memref<1x4x72x128xbf16, #tpu.memory_space<vmem>>, vector<1x1x72x128xbf16>
    %28 = vector.shape_cast %27 : vector<1x1x72x128xbf16> to vector<72x128xbf16>
    %29 = vector.extract_strided_slice %28 {offsets = [0, 0], sizes = [64, 128], strides = [1, 1]} : vector<72x128xbf16> to vector<64x128xbf16>
    %30 = vector.extract_strided_slice %28 {offsets = [8, 0], sizes = [64, 128], strides = [1, 1]} : vector<72x128xbf16> to vector<64x128xbf16>
    %cst_23 = arith.constant dense<0.000000e+00> : vector<64x128xf32>
    %31 = tpu.matmul %29, %1, %cst_23 {dimension_numbers = #tpu.dot_dimension_numbers<[1], [0], [0], [1], [0, 0, 1, 1], [], []>} : vector<64x128xbf16>, vector<128x128xbf16>, vector<64x128xf32> -> vector<64x128xf32>
    %cst_24 = arith.constant dense<0.000000e+00> : vector<64x128xf32>
    %32 = tpu.matmul %30, %3, %cst_24 {dimension_numbers = #tpu.dot_dimension_numbers<[1], [0], [0], [1], [0, 0, 1, 1], [], []>} : vector<64x128xbf16>, vector<128x128xbf16>, vector<64x128xf32> -> vector<64x128xf32>
    %33 = arith.addf %31, %32 : vector<64x128xf32>
    %34 = arith.maximumf %26, %33 : vector<64x128xf32>
    %c0_25 = arith.constant 0 : index
    %c0_26 = arith.constant 0 : index
    %35 = vector.load %arg3[%c0_25, %c0_26] : memref<1x128xf32, #tpu.memory_space<vmem>>, vector<1x128xf32>
    %36 = vector.broadcast %35 : vector<1x128xf32> to vector<64x128xf32>
    %37 = arith.addf %34, %36 : vector<64x128xf32>
    %cst_27 = arith.constant 0.000000e+00 : f32
    %38 = vector.broadcast %cst_27 : f32 to vector<64x128xf32>
    %39 = arith.maximumf %37, %38 : vector<64x128xf32>
    %c0_28 = arith.constant 0 : index
    %c0_29 = arith.constant 0 : index
    %c0_30 = arith.constant 0 : index
    %40 = vector.load %arg4[%c0_28, %c0_29, %c0_30] : memref<1x64x128xf32, #tpu.memory_space<vmem>>, vector<1x64x128xf32>
    %41 = vector.shape_cast %40 : vector<1x64x128xf32> to vector<64x128xf32>
    %42 = vector.shape_cast %39 : vector<64x128xf32> to vector<1x64x128xf32>
    tpu.vector_store %arg4[%c0_28, %c0_29, %c0_30], %42 {strides = array<i32>} : memref<1x64x128xf32, #tpu.memory_space<vmem>>, vector<1x64x128xf32>,
    return
  }
  func.func @transform_0(%arg0: i32) -> (i32, i32, i32, i32) {
    %c0_i32 = arith.constant 0 : i32
    %c0_i32_0 = arith.constant 0 : i32
    %c0_i32_1 = arith.constant 0 : i32
    %c0_i32_2 = arith.constant 0 : i32
    return %arg0, %c0_i32, %c0_i32_0, %c0_i32_1 : i32, i32, i32, i32
  }
  func.func @transform_1(%arg0: i32) -> (i32, i32, i32) {
    %c0_i32 = arith.constant 0 : i32
    %c0_i32_0 = arith.constant 0 : i32
    %c0_i32_1 = arith.constant 0 : i32
    %c0_i32_2 = arith.constant 0 : i32
    return %c0_i32, %c0_i32_0, %c0_i32_1 : i32, i32, i32
  }
  func.func @transform_2(%arg0: i32) -> (i32, i32) {
    %c0_i32 = arith.constant 0 : i32
    %c0_i32_0 = arith.constant 0 : i32
    %c0_i32_1 = arith.constant 0 : i32
    return %c0_i32, %c0_i32_0 : i32, i32
  }
  func.func @transform_3(%arg0: i32) -> (i32, i32, i32) {
    %c0_i32 = arith.constant 0 : i32
    %c0_i32_0 = arith.constant 0 : i32
    %c0_i32_1 = arith.constant 0 : i32
    return %arg0, %c0_i32, %c0_i32_0 : i32, i32, i32
  }
}

</mosaic_0001>

<llo_original>
// kernel: resnet18_forward.1
$region0: #{resnet18_forward.1}
  #allocation0 [shape = 'u32[]', space=smem, size = 0x4, offset = 0x4, fixed_abs, tag = 'smem constant byte address 0x4 - core index']
  #allocation1 [shape = 'u32[72,128]{1,0:T(1,128)}', space=vmem, size = 0x9000, scoped, tag = 'internal scratch']
  %s0 = inlined_call_operand.vmem [shape: bf16[2,4,72,128], index: 0, kind: input, shape index: {}]
  %s1 = inlined_call_operand.vmem [shape: bf16[2,128,128], index: 1, kind: input, shape index: {}]
  %s2 = inlined_call_operand.vmem [shape: f32[1,128], index: 2, kind: input, shape index: {}]
  %s3 = inlined_call_operand.hbm [shape: f32[2,64,128], index: 3, kind: output, shape index: {}]
  %s4 = sld [smem:[#allocation0]]
  $region45: #{resnet18_forward.1} parent=0
    _
  %s6 = ssub.s32 1, %s4
  %s7 = scalar_select 0, %s6, %s4
  $region1: #{resnet18_forward.1} parent=0
    #allocation2 [shape = 'u8[65536]{0}', space=vmem, size = 0x10000, scoped, tag = 'output window, operand 0']
    #allocation3 [shape = 's32[2]{0}', space=sflag, size = 0x8, scoped, tag = 'scoped memory for resnet18_forward.1']
    %8 = vsyncpa [#allocation3], 0
    %s9 = scalar_lea.sflag [#allocation3], 1
    %10 = vsyncpa %s9, 0
    loop: start=0, step=1, limit=4
    $region2: #{resnet18_forward.1} parent=1 // loop_pre_header
      _
    $region3: #{resnet18_forward.1} parent=1 // loop_header
      %s12 = sphi 0, %s16
      %p13 = scmp.ge.s32.totalorder %s12, 4
      %s22 = sphi 0, %s24
      %s25 = sphi 0, %s22
      %s26 = sphi 0, %s25
      %s42 = sphi 0, %s26
      %s46 = sphi 0, %s46
      %s48 = sphi 0, %s46
      %s49 = sphi 0, %s48
      %s63 = sphi 0, %s49
      %s67 = sphi 0, %s67
      %s69 = sphi 0, %s67
      %s70 = sphi 0, %s69
      %s84 = sphi 0, %s70
      %s90 = sphi 0, %s92
      %s93 = sphi 0, %s90
      %s94 = sphi 0, %s93
      %s110 = sphi 0, %s94
    $region4: #{resnet18_forward.1} parent=1 // loop_header_branch
      %15 = sbr.rel (%p13) target = $region8
    $region5: #{resnet18_forward.1} parent=1 // loop_body
      %s17 = ssub.s32 %s12, 1
      %s18 = ssub.s32 %s12, 2
      %s19 = sadd.s32 %s12, 1
      %s20 = ssub.s32 %s12, %s19
      %p21 = scmp.eq.s32.totalorder %s20, 0
      %s23 = sadd.s32 %s22, 1
      %s24 = scalar_select %p21, %s22, %s23
      %p27 = pneg %p21
      %p28 = scmp.eq.s32.totalorder %s12, 1
      %p29 = por %p27, %p28
      %p30 = scmp.ne.s32.totalorder %s22, %s25
      %p31 = scmp.eq.s32.totalorder %s12, 0
      %p32 = por %p30, %p31
      %p33 = scmp.ne.s32.totalorder %s22, %s25
      %p34 = scmp.eq.s32.totalorder %s17, 1
      %p35 = por %p33, %p34
      %p36 = scmp.ne.s32.totalorder %s25, %s26
      %p37 = scmp.eq.s32.totalorder %s17, 0
      %p38 = por %p36, %p37
      %p39 = scmp.ne.s32.totalorder %s25, %s26
      %p40 = scmp.eq.s32.totalorder %s18, 1
      %p41 = por %p39, %p40
      %p43 = scmp.ne.s32.totalorder %s26, %s42
      %p44 = scmp.eq.s32.totalorder %s18, 0
      %p45 = por %p43, %p44
      %s47 = sadd.s32 %s46, 1
      %p50 = scmp.eq.s32.totalorder %s12, 1
      %p51 = scmp.ne.s32.totalorder %s46, %s48
      %p52 = scmp.eq.s32.totalorder %s12, 0
      %p53 = por %p51, %p52
      %p54 = scmp.ne.s32.totalorder %s46, %s48
      %p55 = scmp.eq.s32.totalorder %s17, 1
      %p56 = por %p54, %p55
      %p57 = scmp.ne.s32.totalorder %s48, %s49
      %p58 = scmp.eq.s32.totalorder %s17, 0
      %p59 = por %p57, %p58
      %p60 = scmp.ne.s32.totalorder %s48, %s49
      %p61 = scmp.eq.s32.totalorder %s18, 1
      %p62 = por %p60, %p61
      %p64 = scmp.ne.s32.totalorder %s49, %s63
      %p65 = scmp.eq.s32.totalorder %s18, 0
      %p66 = por %p64, %p65
      %s68 = sadd.s32 %s67, 1
      %p71 = scmp.eq.s32.totalorder %s12, 1
      %p72 = scmp.ne.s32.totalorder %s67, %s69
      %p73 = scmp.eq.s32.totalorder %s12, 0
      %p74 = por %p72, %p73
      %p75 = scmp.ne.s32.totalorder %s67, %s69
      %p76 = scmp.eq.s32.totalorder %s17, 1
      %p77 = por %p75, %p76
      %p78 = scmp.ne.s32.totalorder %s69, %s70
      %p79 = scmp.eq.s32.totalorder %s17, 0
      %p80 = por %p78, %p79
      %p81 = scmp.ne.s32.totalorder %s69, %s70
      %p82 = scmp.eq.s32.totalorder %s18, 1
      %p83 = por %p81, %p82
      %p85 = scmp.ne.s32.totalorder %s70, %s84
      %p86 = scmp.eq.s32.totalorder %s18, 0
      %p87 = por %p85, %p86
      %s88 = ssub.s32 %s12, %s19
      %p89 = scmp.eq.s32.totalorder %s88, 0
      %s91 = sadd.s32 %s90, 1
      %s92 = scalar_select %p89, %s90, %s91
      %p95 = pneg %p89
      %p96 = scmp.eq.s32.totalorder %s12, 1
      %p97 = por %p95, %p96
      %p98 = scmp.ne.s32.totalorder %s90, %s93
      %p99 = scmp.eq.s32.totalorder %s12, 0
      %p100 = por %p98, %p99
      %p101 = scmp.ne.s32.totalorder %s90, %s93
      %p102 = scmp.eq.s32.totalorder %s17, 1
      %p103 = por %p101, %p102
      %p104 = scmp.ne.s32.totalorder %s93, %s94
      %p105 = scmp.eq.s32.totalorder %s17, 0
      %p106 = por %p104, %p105
      %p107 = scmp.ne.s32.totalorder %s93, %s94
      %p108 = scmp.eq.s32.totalorder %s18, 1
      %p109 = por %p107, %p108
      %p111 = scmp.ne.s32.totalorder %s94, %s110
      %p112 = scmp.eq.s32.totalorder %s18, 0
      %p113 = por %p111, %p112
      %p114 = scmp.le.s32.totalorder 1, %s12
      %p115 = scmp.lt.s32.totalorder %s12, 3
      %p116 = pnand %p114, %p115
      %p117 = pneg %p116
      // Predicated region
      $region9: #{resnet18_forward.1} parent=5 // pred_check
        _
      $region10: #{resnet18_forward.1} parent=5 // pred_check_branch
        %119 = sbr.rel (%p116) target = $region12
      $region11: #{resnet18_forward.1} parent=5 // pred_region
        %s120 = ssub.s32 %s12, 1
        // Predicated region
        $region13: #{resnet18_forward.1} parent=11 // pred_check
          %p121 = pneg %p59
        $region14: #{resnet18_forward.1} parent=11 // pred_check_branch
          %123 = sbr.rel (%p121) target = $region16
        $region15: #{resnet18_forward.1} parent=11 // pred_region
          _
        $region16: #{resnet18_forward.1} parent=11 // pred_fallthru
          _
        // Predicated region
        $region17: #{resnet18_forward.1} parent=11 // pred_check
          %p124 = pneg %p80
        $region18: #{resnet18_forward.1} parent=11 // pred_check_branch
          %126 = sbr.rel (%p124) target = $region20
        $region19: #{resnet18_forward.1} parent=11 // pred_region
          _
        $region20: #{resnet18_forward.1} parent=11 // pred_fallthru
          _
      $region12: #{resnet18_forward.1} parent=5 // pred_fallthru
        _
      %p127 = scmp.lt.s32.totalorder %s12, 2
      // Predicated region
      $region21: #{resnet18_forward.1} parent=5 // pred_check
        %p128 = pneg %p127
      $region22: #{resnet18_forward.1} parent=5 // pred_check_branch
        %130 = sbr.rel (%p128) target = $region24
      $region23: #{resnet18_forward.1} parent=5 // pred_region
        // Predicated region
        $region25: #{resnet18_forward.1} parent=23 // pred_check
          %p131 = pneg %p32
        $region26: #{resnet18_forward.1} parent=23 // pred_check_branch
          %133 = sbr.rel (%p131) target = $region28
        $region27: #{resnet18_forward.1} parent=23 // pred_region
          %p134 = scmp.lt.s32.totalorder %s12, 1
          %s135 = scalar_select %p134, %s12, 1
          %s136 = smul.addr %s135, 36
          %s137 = smul.addr %s136, 4
          %s138 = scalar_lea.vmem %s0, %s137
        $region28: #{resnet18_forward.1} parent=23 // pred_fallthru
          _
      $region24: #{resnet18_forward.1} parent=5 // pred_fallthru
        _
      %p139 = scmp.le.s32.totalorder 1, %s12
      %p140 = scmp.lt.s32.totalorder %s12, 3
      %p141 = pnand %p139, %p140
      %p142 = pneg %p141
      // Predicated region
      $region29: #{resnet18_forward.1} parent=5 // pred_check
        _
      $region30: #{resnet18_forward.1} parent=5 // pred_check_branch
        %144 = sbr.rel (%p141) target = $region32
      $region31: #{resnet18_forward.1} parent=5 // pred_region
        %s145 = ssub.s32 %s12, 1
        %p146 = scmp.lt.s32.totalorder %s17, 1
        %s147 = scalar_select %p146, %s17, 1
        %s148 = smul.addr %s147, 36
        %s149 = smul.addr %s148, 4
        %s150 = scalar_lea.vmem %s0, %s149
        %p151 = pneg %p38
        %p152 = pneg %p35
        %p153 = pneg %p59
        %p154 = pneg %p56
        %p155 = pneg %p80
        %p156 = pneg %p77
        %p157 = pneg %p106
        %p158 = pneg %p103
        %s159 = sand.u32 %s93, 1
        %s160 = scalar_lea.sflag [#allocation3], %s159
        %s161 = sand.u32 %s93, 1
        %s162 = smul.addr %s161, 64
        %s163 = scalar_lea.vmem [#allocation2], %s162
        %p164 = scmp.lt.s32.totalorder %s17, 1
        %s165 = scalar_select %p164, %s17, 1
        %s166 = smul.addr %s165, 36
        %s167 = smul.addr %s166, 4
        %s168 = scalar_lea.vmem %s0, %s167
        %v169 = vld [vmem:[%s1] sm:$0xf]
        %v170 = vld [vmem:[%s1 + $0x4] sm:$0xf]
        %v171 = vld [vmem:[%s1 + $0x8] sm:$0xf]
        %v172 = vld [vmem:[%s1 + $0xc] sm:$0xf]
        %v173 = vld [vmem:[%s1 + $0x10] sm:$0xf]
        %v174 = vld [vmem:[%s1 + $0x14] sm:$0xf]
        %v175 = vld [vmem:[%s1 + $0x18] sm:$0xf]
        %v176 = vld [vmem:[%s1 + $0x1c] sm:$0xf]
        %v177 = vld [vmem:[%s1 + $0x20] sm:$0xf]
        %v178 = vld [vmem:[%s1 + $0x24] sm:$0xf]
        %v179 = vld [vmem:[%s1 + $0x28] sm:$0xf]
        %v180 = vld [vmem:[%s1 + $0x2c] sm:$0xf]
        %v181 = vld [vmem:[%s1 + $0x30] sm:$0xf]
        %v182 = vld [vmem:[%s1 + $0x34] sm:$0xf]
        %v183 = vld [vmem:[%s1 + $0x38] sm:$0xf]
        %v184 = vld [vmem:[%s1 + $0x3c] sm:$0xf]
        %s185 = scalar_lea.vmem %s1, 64
        %v186 = vld [vmem:[%s185] sm:$0xf]
        %v187 = vld [vmem:[%s185 + $0x4] sm:$0xf]
        %v188 = vld [vmem:[%s185 + $0x8] sm:$0xf]
        %v189 = vld [vmem:[%s185 + $0xc] sm:$0xf]
        %v190 = vld [vmem:[%s185 + $0x10] sm:$0xf]
        %v191 = vld [vmem:[%s185 + $0x14] sm:$0xf]
        %v192 = vld [vmem:[%s185 + $0x18] sm:$0xf]
        %v193 = vld [vmem:[%s185 + $0x1c] sm:$0xf]
        %v194 = vld [vmem:[%s185 + $0x20] sm:$0xf]
        %v195 = vld [vmem:[%s185 + $0x24] sm:$0xf]
        %v196 = vld [vmem:[%s185 + $0x28] sm:$0xf]
        %v197 = vld [vmem:[%s185 + $0x2c] sm:$0xf]
        %v198 = vld [vmem:[%s185 + $0x30] sm:$0xf]
        %v199 = vld [vmem:[%s185 + $0x34] sm:$0xf]
        %v200 = vld [vmem:[%s185 + $0x38] sm:$0xf]
        %v201 = vld [vmem:[%s185 + $0x3c] sm:$0xf]
        %v202 = vld [vmem:[%s168] sm:$0xf]
        %v203 = vld [vmem:[%s168 + $0x4] sm:$0xf]
        %v204 = vld [vmem:[%s168 + $0x8] sm:$0xf]
        %v205 = vld [vmem:[%s168 + $0xc] sm:$0xf]
        %v206 = vld [vmem:[%s168 + $0x10] sm:$0xf]
        %v207 = vld [vmem:[%s168 + $0x14] sm:$0xf]
        %v208 = vld [vmem:[%s168 + $0x18] sm:$0xf]
        %v209 = vld [vmem:[%s168 + $0x1c] sm:$0xf]
        %v210 = vld [vmem:[%s168 + $0x20] sm:$0xf]
        %v219 = vunpack.c.l.b16 %v203
        %v220 = vunpack.c.l.b16 %v204
        %v221 = vunpack.c.l.b16 %v205
        %v222 = vunpack.c.l.b16 %v206
        %v223 = vunpack.c.l.b16 %v207
        %v224 = vunpack.c.l.b16 %v208
        %v225 = vunpack.c.l.b16 %v209
        %v226 = vunpack.c.l.b16 %v210
        %v227 = vpack.c.b16 %v220, %v219
        %v228 = vpack.c.b16 %v222, %v221
        %v229 = vpack.c.b16 %v224, %v223
        %v230 = vpack.c.b16 %v226, %v225
        %v251 = vunpack.c.l.b16 %v186
        %v252 = vunpack.c.l.b16 %v187
        %v253 = vunpack.c.l.b16 %v188
        %v254 = vunpack.c.l.b16 %v189
        %v255 = vunpack.c.l.b16 %v190
        %v256 = vunpack.c.l.b16 %v191
        %v257 = vunpack.c.l.b16 %v192
        %v258 = vunpack.c.l.b16 %v193
        %v259 = vunpack.c.l.b16 %v194
        %v260 = vunpack.c.l.b16 %v195
        %v261 = vunpack.c.l.b16 %v196
        %v262 = vunpack.c.l.b16 %v197
        %v263 = vunpack.c.l.b16 %v198
        %v264 = vunpack.c.l.b16 %v199
        %v265 = vunpack.c.l.b16 %v200
        %v266 = vunpack.c.l.b16 %v201
        %v267 = vpack.c.b16 %v252, %v251
        %v268 = vpack.c.b16 %v254, %v253
        %v269 = vpack.c.b16 %v256, %v255
        %v270 = vpack.c.b16 %v258, %v257
        %v271 = vpack.c.b16 %v260, %v259
        %v272 = vpack.c.b16 %v262, %v261
        %v273 = vpack.c.b16 %v264, %v263
        %v274 = vpack.c.b16 %v266, %v265
        %283 = vmatpush.bf16.msra.mxu0 %v274
        %284 = vmatpush.bf16.msra.mxu0 %v273
        %285 = vmatpush.bf16.msra.mxu0 %v272
        %286 = vmatpush.bf16.msra.mxu0 %v271
        %287 = vmatpush.bf16.msra.mxu0 %v270
        %288 = vmatpush.bf16.msra.mxu0 %v269
        %289 = vmatpush.bf16.msra.mxu0 %v268
        %290 = vmatpush.bf16.msra.mxu0 %v267
        %291 = vmatmul.bf16.gmra.mxu0 %v227
        %v292 = vpop.f32.mrf.mxu0
        %v293 = vadd.f32 0.0, %v292
        %v294 = vpop.f32.mrf.mxu0
        %v295 = vadd.f32 0.0, %v294
        %296 = vmatmul.bf16.gmra.mxu0 %v228
        %v297 = vpop.f32.mrf.mxu0
        %v298 = vadd.f32 0.0, %v297
        %v299 = vpop.f32.mrf.mxu0
        %v300 = vadd.f32 0.0, %v299
        %301 = vmatmul.bf16.gmra.mxu0 %v229
        %v302 = vpop.f32.mrf.mxu0
        %v303 = vadd.f32 0.0, %v302
        %v304 = vpop.f32.mrf.mxu0
        %v305 = vadd.f32 0.0, %v304
        %306 = vmatmul.bf16.gmra.mxu0 %v230
        %v307 = vpop.f32.mrf.mxu0
        %v308 = vadd.f32 0.0, %v307
        %v309 = vpop.f32.mrf.mxu0
        %v310 = vadd.f32 0.0, %v309
        %311 = vdwg.mxu0
        %v313 = vunpack.c.l.b16 %v202
        %v314 = vpack.c.b16 %v219, %v313
        %v315 = vpack.c.b16 %v221, %v220
        %v316 = vpack.c.b16 %v223, %v222
        %v317 = vpack.c.b16 %v225, %v224
        %v338 = vunpack.c.l.b16 %v169
        %v339 = vunpack.c.l.b16 %v170
        %v340 = vunpack.c.l.b16 %v171
        %v341 = vunpack.c.l.b16 %v172
        %v342 = vunpack.c.l.b16 %v173
        %v343 = vunpack.c.l.b16 %v174
        %v344 = vunpack.c.l.b16 %v175
        %v345 = vunpack.c.l.b16 %v176
        %v346 = vunpack.c.l.b16 %v177
        %v347 = vunpack.c.l.b16 %v178
        %v348 = vunpack.c.l.b16 %v179
        %v349 = vunpack.c.l.b16 %v180
        %v350 = vunpack.c.l.b16 %v181
        %v351 = vunpack.c.l.b16 %v182
        %v352 = vunpack.c.l.b16 %v183
        %v353 = vunpack.c.l.b16 %v184
        %v354 = vpack.c.b16 %v339, %v338
        %v355 = vpack.c.b16 %v341, %v340
        %v356 = vpack.c.b16 %v343, %v342
        %v357 = vpack.c.b16 %v345, %v344
        %v358 = vpack.c.b16 %v347, %v346
        %v359 = vpack.c.b16 %v349, %v348
        %v360 = vpack.c.b16 %v351, %v350
        %v361 = vpack.c.b16 %v353, %v352
        %370 = vmatpush.bf16.msra.mxu0 %v361
        %371 = vmatpush.bf16.msra.mxu0 %v360
        %372 = vmatpush.bf16.msra.mxu0 %v359
        %373 = vmatpush.bf16.msra.mxu0 %v358
        %374 = vmatpush.bf16.msra.mxu0 %v357
        %375 = vmatpush.bf16.msra.mxu0 %v356
        %376 = vmatpush.bf16.msra.mxu0 %v355
        %377 = vmatpush.bf16.msra.mxu0 %v354
        %378 = vmatmul.bf16.gmra.mxu0 %v314
        %v379 = vpop.f32.mrf.mxu0
        %v380 = vadd.f32 %v293, %v379
        %v381 = vpop.f32.mrf.mxu0
        %v382 = vadd.f32 %v295, %v381
        %383 = vmatmul.bf16.gmra.mxu0 %v315
        %v384 = vpop.f32.mrf.mxu0
        %v385 = vadd.f32 %v298, %v384
        %v386 = vpop.f32.mrf.mxu0
        %v387 = vadd.f32 %v300, %v386
        %388 = vmatmul.bf16.gmra.mxu0 %v316
        %v389 = vpop.f32.mrf.mxu0
        %v390 = vadd.f32 %v303, %v389
        %v391 = vpop.f32.mrf.mxu0
        %v392 = vadd.f32 %v305, %v391
        %393 = vmatmul.bf16.gmra.mxu0 %v317
        %v394 = vpop.f32.mrf.mxu0
        %v395 = vadd.f32 %v308, %v394
        %v396 = vpop.f32.mrf.mxu0
        %v397 = vadd.f32 %v310, %v396
        %398 = vdwg.mxu0
        %s399 = scalar_lea.vmem %s168, 36
        %v400 = vld [vmem:[%s399] sm:$0xf]
        %v401 = vld [vmem:[%s399 + $0x4] sm:$0xf]
        %v402 = vld [vmem:[%s399 + $0x8] sm:$0xf]
        %v403 = vld [vmem:[%s399 + $0xc] sm:$0xf]
        %v404 = vld [vmem:[%s399 + $0x10] sm:$0xf]
        %v405 = vld [vmem:[%s399 + $0x14] sm:$0xf]
        %v406 = vld [vmem:[%s399 + $0x18] sm:$0xf]
        %v407 = vld [vmem:[%s399 + $0x1c] sm:$0xf]
        %v408 = vld [vmem:[%s399 + $0x20] sm:$0xf]
        %v417 = vunpack.c.l.b16 %v401
        %v418 = vunpack.c.l.b16 %v402
        %v419 = vunpack.c.l.b16 %v403
        %v420 = vunpack.c.l.b16 %v404
        %v421 = vunpack.c.l.b16 %v405
        %v422 = vunpack.c.l.b16 %v406
        %v423 = vunpack.c.l.b16 %v407
        %v424 = vunpack.c.l.b16 %v408
        %v425 = vpack.c.b16 %v418, %v417
        %v426 = vpack.c.b16 %v420, %v419
        %v427 = vpack.c.b16 %v422, %v421
        %v428 = vpack.c.b16 %v424, %v423
        %433 = vmatpush.bf16.msra.mxu0 %v274
        %434 = vmatpush.bf16.msra.mxu0 %v273
        %435 = vmatpush.bf16.msra.mxu0 %v272
        %436 = vmatpush.bf16.msra.mxu0 %v271
        %437 = vmatpush.bf16.msra.mxu0 %v270
        %438 = vmatpush.bf16.msra.mxu0 %v269
        %439 = vmatpush.bf16.msra.mxu0 %v268
        %440 = vmatpush.bf16.msra.mxu0 %v267
        %441 = vmatmul.bf16.gmra.mxu0 %v425
        %v442 = vpop.f32.mrf.mxu0
        %v443 = vadd.f32 0.0, %v442
        %v444 = vpop.f32.mrf.mxu0
        %v445 = vadd.f32 0.0, %v444
        %446 = vmatmul.bf16.gmra.mxu0 %v426
        %v447 = vpop.f32.mrf.mxu0
        %v448 = vadd.f32 0.0, %v447
        %v449 = vpop.f32.mrf.mxu0
        %v450 = vadd.f32 0.0, %v449
        %451 = vmatmul.bf16.gmra.mxu0 %v427
        %v452 = vpop.f32.mrf.mxu0
        %v453 = vadd.f32 0.0, %v452
        %v454 = vpop.f32.mrf.mxu0
        %v455 = vadd.f32 0.0, %v454
        %456 = vmatmul.bf16.gmra.mxu0 %v428
        %v457 = vpop.f32.mrf.mxu0
        %v458 = vadd.f32 0.0, %v457
        %v459 = vpop.f32.mrf.mxu0
        %v460 = vadd.f32 0.0, %v459
        %461 = vdwg.mxu0
        %v463 = vunpack.c.l.b16 %v400
        %v464 = vpack.c.b16 %v417, %v463
        %v465 = vpack.c.b16 %v419, %v418
        %v466 = vpack.c.b16 %v421, %v420
        %v467 = vpack.c.b16 %v423, %v422
        %472 = vmatpush.bf16.msra.mxu0 %v361
        %473 = vmatpush.bf16.msra.mxu0 %v360
        %474 = vmatpush.bf16.msra.mxu0 %v359
        %475 = vmatpush.bf16.msra.mxu0 %v358
        %476 = vmatpush.bf16.msra.mxu0 %v357
        %477 = vmatpush.bf16.msra.mxu0 %v356
        %478 = vmatpush.bf16.msra.mxu0 %v355
        %479 = vmatpush.bf16.msra.mxu0 %v354
        %480 = vmatmul.bf16.gmra.mxu0 %v464
        %v481 = vpop.f32.mrf.mxu0
        %v482 = vadd.f32 %v443, %v481
        %v483 = vpop.f32.mrf.mxu0
        %v484 = vadd.f32 %v445, %v483
        %485 = vmatmul.bf16.gmra.mxu0 %v465
        %v486 = vpop.f32.mrf.mxu0
        %v487 = vadd.f32 %v448, %v486
        %v488 = vpop.f32.mrf.mxu0
        %v489 = vadd.f32 %v450, %v488
        %490 = vmatmul.bf16.gmra.mxu0 %v466
        %v491 = vpop.f32.mrf.mxu0
        %v492 = vadd.f32 %v453, %v491
        %v493 = vpop.f32.mrf.mxu0
        %v494 = vadd.f32 %v455, %v493
        %495 = vmatmul.bf16.gmra.mxu0 %v467
        %v496 = vpop.f32.mrf.mxu0
        %v497 = vadd.f32 %v458, %v496
        %v498 = vpop.f32.mrf.mxu0
        %v499 = vadd.f32 %v460, %v498
        %500 = vdwg.mxu0
        %v501 = vmax.f32 %v380, %v482
        %v502 = vmax.f32 %v382, %v484
        %v503 = vmax.f32 %v385, %v487
        %v504 = vmax.f32 %v387, %v489
        %v505 = vmax.f32 %v390, %v492
        %v506 = vmax.f32 %v392, %v494
        %v507 = vmax.f32 %v395, %v497
        %v508 = vmax.f32 %v397, %v499
        %s509 = scalar_lea.vmem %s168, 72
        %v510 = vld [vmem:[%s509] sm:$0xf]
        %v511 = vld [vmem:[%s509 + $0x4] sm:$0xf]
        %v512 = vld [vmem:[%s509 + $0x8] sm:$0xf]
        %v513 = vld [vmem:[%s509 + $0xc] sm:$0xf]
        %v514 = vld [vmem:[%s509 + $0x10] sm:$0xf]
        %v515 = vld [vmem:[%s509 + $0x14] sm:$0xf]
        %v516 = vld [vmem:[%s509 + $0x18] sm:$0xf]
        %v517 = vld [vmem:[%s509 + $0x1c] sm:$0xf]
        %v518 = vld [vmem:[%s509 + $0x20] sm:$0xf]
        %v527 = vunpack.c.l.b16 %v511
        %v528 = vunpack.c.l.b16 %v512
        %v529 = vunpack.c.l.b16 %v513
        %v530 = vunpack.c.l.b16 %v514
        %v531 = vunpack.c.l.b16 %v515
        %v532 = vunpack.c.l.b16 %v516
        %v533 = vunpack.c.l.b16 %v517
        %v534 = vunpack.c.l.b16 %v518
        %v535 = vpack.c.b16 %v528, %v527
        %v536 = vpack.c.b16 %v530, %v529
        %v537 = vpack.c.b16 %v532, %v531
        %v538 = vpack.c.b16 %v534, %v533
        %543 = vmatpush.bf16.msra.mxu0 %v274
        %544 = vmatpush.bf16.msra.mxu0 %v273
        %545 = vmatpush.bf16.msra.mxu0 %v272
        %546 = vmatpush.bf16.msra.mxu0 %v271
        %547 = vmatpush.bf16.msra.mxu0 %v270
        %548 = vmatpush.bf16.msra.mxu0 %v269
        %549 = vmatpush.bf16.msra.mxu0 %v268
        %550 = vmatpush.bf16.msra.mxu0 %v267
        %551 = vmatmul.bf16.gmra.mxu0 %v535
        %v552 = vpop.f32.mrf.mxu0
        %v553 = vadd.f32 0.0, %v552
        %v554 = vpop.f32.mrf.mxu0
        %v555 = vadd.f32 0.0, %v554
        %556 = vmatmul.bf16.gmra.mxu0 %v536
        %v557 = vpop.f32.mrf.mxu0
        %v558 = vadd.f32 0.0, %v557
        %v559 = vpop.f32.mrf.mxu0
        %v560 = vadd.f32 0.0, %v559
        %561 = vmatmul.bf16.gmra.mxu0 %v537
        %v562 = vpop.f32.mrf.mxu0
        %v563 = vadd.f32 0.0, %v562
        %v564 = vpop.f32.mrf.mxu0
        %v565 = vadd.f32 0.0, %v564
        %566 = vmatmul.bf16.gmra.mxu0 %v538
        %v567 = vpop.f32.mrf.mxu0
        %v568 = vadd.f32 0.0, %v567
        %v569 = vpop.f32.mrf.mxu0
        %v570 = vadd.f32 0.0, %v569
        %571 = vdwg.mxu0
        %v573 = vunpack.c.l.b16 %v510
        %v574 = vpack.c.b16 %v527, %v573
        %v575 = vpack.c.b16 %v529, %v528
        %v576 = vpack.c.b16 %v531, %v530
        %v577 = vpack.c.b16 %v533, %v532
        %582 = vmatpush.bf16.msra.mxu0 %v361
        %583 = vmatpush.bf16.msra.mxu0 %v360
        %584 = vmatpush.bf16.msra.mxu0 %v359
        %585 = vmatpush.bf16.msra.mxu0 %v358
        %586 = vmatpush.bf16.msra.mxu0 %v357
        %587 = vmatpush.bf16.msra.mxu0 %v356
        %588 = vmatpush.bf16.msra.mxu0 %v355
        %589 = vmatpush.bf16.msra.mxu0 %v354
        %590 = vmatmul.bf16.gmra.mxu0 %v574
        %v591 = vpop.f32.mrf.mxu0
        %v592 = vadd.f32 %v553, %v591
        %v593 = vpop.f32.mrf.mxu0
        %v594 = vadd.f32 %v555, %v593
        %595 = vmatmul.bf16.gmra.mxu0 %v575
        %v596 = vpop.f32.mrf.mxu0
        %v597 = vadd.f32 %v558, %v596
        %v598 = vpop.f32.mrf.mxu0
        %v599 = vadd.f32 %v560, %v598
        %600 = vmatmul.bf16.gmra.mxu0 %v576
        %v601 = vpop.f32.mrf.mxu0
        %v602 = vadd.f32 %v563, %v601
        %v603 = vpop.f32.mrf.mxu0
        %v604 = vadd.f32 %v565, %v603
        %605 = vmatmul.bf16.gmra.mxu0 %v577
        %v606 = vpop.f32.mrf.mxu0
        %v607 = vadd.f32 %v568, %v606
        %v608 = vpop.f32.mrf.mxu0
        %v609 = vadd.f32 %v570, %v608
        %610 = vdwg.mxu0
        %v611 = vmax.f32 %v501, %v592
        %v612 = vmax.f32 %v502, %v594
        %v613 = vmax.f32 %v503, %v597
        %v614 = vmax.f32 %v504, %v599
        %v615 = vmax.f32 %v505, %v602
        %v616 = vmax.f32 %v506, %v604
        %v617 = vmax.f32 %v507, %v607
        %v618 = vmax.f32 %v508, %v609
        %s619 = scalar_lea.vmem %s168, 108
        %v620 = vld [vmem:[%s619] sm:$0xf]
        %v621 = vld [vmem:[%s619 + $0x4] sm:$0xf]
        %v622 = vld [vmem:[%s619 + $0x8] sm:$0xf]
        %v623 = vld [vmem:[%s619 + $0xc] sm:$0xf]
        %v624 = vld [vmem:[%s619 + $0x10] sm:$0xf]
        %v625 = vld [vmem:[%s619 + $0x14] sm:$0xf]
        %v626 = vld [vmem:[%s619 + $0x18] sm:$0xf]
        %v627 = vld [vmem:[%s619 + $0x1c] sm:$0xf]
        %v628 = vld [vmem:[%s619 + $0x20] sm:$0xf]
        %v637 = vunpack.c.l.b16 %v621
        %v638 = vunpack.c.l.b16 %v622
        %v639 = vunpack.c.l.b16 %v623
        %v640 = vunpack.c.l.b16 %v624
        %v641 = vunpack.c.l.b16 %v625
        %v642 = vunpack.c.l.b16 %v626
        %v643 = vunpack.c.l.b16 %v627
        %v644 = vunpack.c.l.b16 %v628
        %v645 = vpack.c.b16 %v638, %v637
        %v646 = vpack.c.b16 %v640, %v639
        %v647 = vpack.c.b16 %v642, %v641
        %v648 = vpack.c.b16 %v644, %v643
        %653 = vmatpush.bf16.msra.mxu0 %v274
        %654 = vmatpush.bf16.msra.mxu0 %v273
        %655 = vmatpush.bf16.msra.mxu0 %v272
        %656 = vmatpush.bf16.msra.mxu0 %v271
        %657 = vmatpush.bf16.msra.mxu0 %v270
        %658 = vmatpush.bf16.msra.mxu0 %v269
        %659 = vmatpush.bf16.msra.mxu0 %v268
        %660 = vmatpush.bf16.msra.mxu0 %v267
        %661 = vmatmul.bf16.gmra.mxu0 %v645
        %v662 = vpop.f32.mrf.mxu0
        %v663 = vadd.f32 0.0, %v662
        %v664 = vpop.f32.mrf.mxu0
        %v665 = vadd.f32 0.0, %v664
        %666 = vmatmul.bf16.gmra.mxu0 %v646
        %v667 = vpop.f32.mrf.mxu0
        %v668 = vadd.f32 0.0, %v667
        %v669 = vpop.f32.mrf.mxu0
        %v670 = vadd.f32 0.0, %v669
        %671 = vmatmul.bf16.gmra.mxu0 %v647
        %v672 = vpop.f32.mrf.mxu0
        %v673 = vadd.f32 0.0, %v672
        %v674 = vpop.f32.mrf.mxu0
        %v675 = vadd.f32 0.0, %v674
        %676 = vmatmul.bf16.gmra.mxu0 %v648
        %v677 = vpop.f32.mrf.mxu0
        %v678 = vadd.f32 0.0, %v677
        %v679 = vpop.f32.mrf.mxu0
        %v680 = vadd.f32 0.0, %v679
        %681 = vdwg.mxu0
        %v683 = vunpack.c.l.b16 %v620
        %v684 = vpack.c.b16 %v637, %v683
        %v685 = vpack.c.b16 %v639, %v638
        %v686 = vpack.c.b16 %v641, %v640
        %v687 = vpack.c.b16 %v643, %v642
        %692 = vmatpush.bf16.msra.mxu0 %v361
        %693 = vmatpush.bf16.msra.mxu0 %v360
        %694 = vmatpush.bf16.msra.mxu0 %v359
        %695 = vmatpush.bf16.msra.mxu0 %v358
        %696 = vmatpush.bf16.msra.mxu0 %v357
        %697 = vmatpush.bf16.msra.mxu0 %v356
        %698 = vmatpush.bf16.msra.mxu0 %v355
        %699 = vmatpush.bf16.msra.mxu0 %v354
        %700 = vmatmul.bf16.gmra.mxu0 %v684
        %v701 = vpop.f32.mrf.mxu0
        %v702 = vadd.f32 %v663, %v701
        %v703 = vpop.f32.mrf.mxu0
        %v704 = vadd.f32 %v665, %v703
        %705 = vmatmul.bf16.gmra.mxu0 %v685
        %v706 = vpop.f32.mrf.mxu0
        %v707 = vadd.f32 %v668, %v706
        %v708 = vpop.f32.mrf.mxu0
        %v709 = vadd.f32 %v670, %v708
        %710 = vmatmul.bf16.gmra.mxu0 %v686
        %v711 = vpop.f32.mrf.mxu0
        %v712 = vadd.f32 %v673, %v711
        %v713 = vpop.f32.mrf.mxu0
        %v714 = vadd.f32 %v675, %v713
        %715 = vmatmul.bf16.gmra.mxu0 %v687
        %v716 = vpop.f32.mrf.mxu0
        %v717 = vadd.f32 %v678, %v716
        %v718 = vpop.f32.mrf.mxu0
        %v719 = vadd.f32 %v680, %v718
        %720 = vdwg.mxu0
        %v721 = vmax.f32 %v611, %v702
        %v722 = vmax.f32 %v612, %v704
        %v723 = vmax.f32 %v613, %v707
        %v724 = vmax.f32 %v614, %v709
        %v725 = vmax.f32 %v615, %v712
        %v726 = vmax.f32 %v616, %v714
        %v727 = vmax.f32 %v617, %v717
        %v728 = vmax.f32 %v618, %v719
        %v729 = vld [vmem:[%s2] sm:$0x1]
        %v731 = vperm.slane %v729, 0
        %v733 = vadd.f32 %v721, %v731
        %v734 = vadd.f32 %v722, %v731
        %v735 = vadd.f32 %v723, %v731
        %v736 = vadd.f32 %v724, %v731
        %v737 = vadd.f32 %v725, %v731
        %v738 = vadd.f32 %v726, %v731
        %v739 = vadd.f32 %v727, %v731
        %v740 = vadd.f32 %v728, %v731
        %v741 = vmax.f32 %v733, 0.0
        %v742 = vmax.f32 %v734, 0.0
        %v743 = vmax.f32 %v735, 0.0
        %v744 = vmax.f32 %v736, 0.0
        %v745 = vmax.f32 %v737, 0.0
        %v746 = vmax.f32 %v738, 0.0
        %v747 = vmax.f32 %v739, 0.0
        %v748 = vmax.f32 %v740, 0.0
        %749 = vst [vmem:[%s163] sm:$0xff] %v741
        %750 = vst [vmem:[%s163 + $0x8] sm:$0xff] %v742
        %751 = vst [vmem:[%s163 + $0x10] sm:$0xff] %v743
        %752 = vst [vmem:[%s163 + $0x18] sm:$0xff] %v744
        %753 = vst [vmem:[%s163 + $0x20] sm:$0xff] %v745
        %754 = vst [vmem:[%s163 + $0x28] sm:$0xff] %v746
        %755 = vst [vmem:[%s163 + $0x30] sm:$0xff] %v747
        %756 = vst [vmem:[%s163 + $0x38] sm:$0xff] %v748
        %s757 = sand.u32 %s93, 1
        %s758 = scalar_lea.sflag [#allocation3], %s757
        %s759 = sand.u32 %s93, 1
        %s760 = smul.addr %s759, 64
        %s761 = scalar_lea.vmem [#allocation2], %s760
        // Predicated region
        $region33: #{resnet18_forward.1} parent=31 // pred_check
          %p762 = pneg %p103
        $region34: #{resnet18_forward.1} parent=31 // pred_check_branch
          %764 = sbr.rel (%p762) target = $region36
        $region35: #{resnet18_forward.1} parent=31 // pred_region
          %766 = vsyncadd %s758, 0
          %s767 = smul.addr %s17, 8
          %s768 = smul.addr %s767, 8
          %s769 = scalar_lea.hbm %s3, %s768
          %s770 = sshll.u32 %s761, 4
          %s771 = int_to_ptr.vmem [resolvable:$true] %s770
          %s772 = sshll.u32 %s769, 4
          %s773 = int_to_ptr.hbm [resolvable:$true] %s772
          %778 = dma.vmem_to_hbm [thread:$0]  %s771, 1024, %s773, %s758, 128, 128, 8
        $region36: #{resnet18_forward.1} parent=31 // pred_fallthru
          _
      $region32: #{resnet18_forward.1} parent=5 // pred_fallthru
        _
      %p779 = scmp.le.s32.totalorder 2, %s12
      // Predicated region
      $region37: #{resnet18_forward.1} parent=5 // pred_check
        %p780 = pneg %p779
      $region38: #{resnet18_forward.1} parent=5 // pred_check_branch
        %782 = sbr.rel (%p780) target = $region40
      $region39: #{resnet18_forward.1} parent=5 // pred_region
        %s783 = ssub.s32 %s12, 2
        // Predicated region
        $region41: #{resnet18_forward.1} parent=39 // pred_check
          %p784 = pneg %p109
        $region42: #{resnet18_forward.1} parent=39 // pred_check_branch
          %786 = sbr.rel (%p784) target = $region44
        $region43: #{resnet18_forward.1} parent=39 // pred_region
          %s787 = sand.u32 %s94, 1
          %s788 = scalar_lea.sflag [#allocation3], %s787
          %s789 = sand.u32 %s94, 1
          %s790 = smul.addr %s789, 64
          %s791 = scalar_lea.vmem [#allocation2], %s790
          %793 = dma.done %s788, 1024
        $region44: #{resnet18_forward.1} parent=39 // pred_fallthru
          _
      $region40: #{resnet18_forward.1} parent=5 // pred_fallthru
        _
    $region6: #{resnet18_forward.1} parent=1 // loop_footer
      %s16 = sadd.s32 1, %s12
    $region7: #{resnet18_forward.1} parent=1 // loop_footer_branch
      %11 = sbr.rel target = $region3
    $region8: #{resnet18_forward.1} parent=1 // loop_exit
      _
    %794 = vsyncpa [#allocation3], 1
    %s795 = scalar_lea.sflag [#allocation3], 1
    %796 = vsyncpa %s795, 1

</llo_original>
